<compile_context>
chip_gen: v7x
topology: tpu7x:2x2x1
jax: 0.10.0
libtpu: 0.0.40
codegen_flags: <defaults>
</compile_context>

<pallas_src>
import jax
import jax.numpy as jnp
from jax.experimental import pallas as pl
from jax.experimental.pallas import tpu as pltpu

_EPS = 1e-5  # PyTorch BatchNorm1d default eps


# --------------------------------------------------------------------------
# Kernel: everything is (rows_on_sublanes, batch_on_lanes)
# --------------------------------------------------------------------------
def cnnd_kernel(x_ref, w1_ref, w2_ref, w3_ref, wfc_ref, b_ref, out_ref):
    f32 = jnp.float32
    x = x_ref[...]                                               # (16, TN)

    # layer 1: Conv1d(1->8,k=2)+BN folded into banded matmul; pool = half-max
    y = jnp.dot(w1_ref[...], x, preferred_element_type=f32)      # (112, TN)
    y = jnp.maximum(y + b_ref[0:112, 0:1], 0.0)
    h = jnp.maximum(y[0:56, :], y[56:112, :])                    # (56, TN)

    # layer 2: Conv1d(8->16,k=2)+BN
    y = jnp.dot(w2_ref[...], h, preferred_element_type=f32)      # (96, TN)
    y = jnp.maximum(y + b_ref[0:96, 1:2], 0.0)
    h = jnp.maximum(y[0:48, :], y[48:96, :])                     # (48, TN)

    # layer 3: Conv1d(16->64,k=2)+BN
    y = jnp.dot(w3_ref[...], h, preferred_element_type=f32)      # (128, TN)
    y = jnp.maximum(y + b_ref[0:128, 2:3], 0.0)
    h = jnp.maximum(y[0:64, :], y[64:128, :])                    # (64, TN)

    # fc: Linear(64 -> 8), lane-dense (8, TN) output
    out_ref[...] = (jnp.dot(wfc_ref[...], h, preferred_element_type=f32)
                    + b_ref[0:8, 3:4])


# --------------------------------------------------------------------------
# Wrapper
# --------------------------------------------------------------------------
def _ceil_to(a, b):
    return -(-a // b) * b


def cnnd_forward(x_ncl, kernel_params):
    """x_ncl: (N, 1, 16) float32 (PyTorch NCL). Returns (N, 8)."""
    w1b, w2b, w3b, wfc, bias = kernel_params
    n, c_in, length = x_ncl.shape
    assert (c_in, length) == (1, 16), "CNND requires input shape (N, 1, 16)"

    # Batch on lanes: x -> (L=16, N) dense block.
    x_ln = jnp.transpose(x_ncl[:, 0, :], (1, 0)).astype(jnp.float32)  # (16, N)

    # Batch tile: lane-aligned (multiple of 128), up to 1024.  If the whole
    # batch would fit in one big tile, split it so the grid has >= 2 steps
    # (lets "parallel" shard across v7x's two TensorCores).
    n128 = _ceil_to(n, 128)
    tn = min(1024, n128)
    if n128 // tn == 1 and n128 > 256:
        tn = _ceil_to(n128 // 2, 128)
    npad = _ceil_to(n, tn)
    if npad != n:
        x_ln = jnp.pad(x_ln, ((0, 0), (0, npad - n)))

    out = pl.pallas_call(
        cnnd_kernel,
        out_shape=jax.ShapeDtypeStruct((8, npad), jnp.float32),
        grid=(npad // tn,),
        in_specs=[
            pl.BlockSpec((16, tn), lambda i: (0, i)),     # x batch tile
            pl.BlockSpec((112, 16), lambda i: (0, 0)),    # layer-1 banded weights
            pl.BlockSpec((96, 56), lambda i: (0, 0)),     # layer-2 banded weights
            pl.BlockSpec((128, 48), lambda i: (0, 0)),    # layer-3 banded weights
            pl.BlockSpec((8, 64), lambda i: (0, 0)),      # fc weights
            pl.BlockSpec((128, 4), lambda i: (0, 0)),     # packed (tiled) biases
        ],
        out_specs=pl.BlockSpec((8, tn), lambda i: (0, i)),
        compiler_params=pltpu.CompilerParams(
            dimension_semantics=("parallel",),
            vmem_limit_bytes=32 * 1024 * 1024),
    )(x_ln, w1b, w2b, w3b, wfc, bias)
    return jnp.transpose(out[:, :n])                      # (N, 8)


# --------------------------------------------------------------------------
# Parameter construction (PyTorch layouts) + BN folding / packing
# --------------------------------------------------------------------------
def init_torch_params(key):
    """Deterministic synthetic parameters with PyTorch layouts."""
    def conv_bn(k, cin, cout):
        kw, kb, kg, kbe, krm, krv = jax.random.split(k, 6)
        w = jax.random.normal(kw, (cout, cin, 2), jnp.float32) / jnp.sqrt(2.0 * cin)
        b = 0.1 * jax.random.normal(kb, (cout,), jnp.float32)
        gamma = 1.0 + 0.1 * jax.random.normal(kg, (cout,), jnp.float32)
        beta = 0.1 * jax.random.normal(kbe, (cout,), jnp.float32)
        rmean = 0.1 * jax.random.normal(krm, (cout,), jnp.float32)
        rvar = 1.0 + 0.1 * jnp.abs(jax.random.normal(krv, (cout,), jnp.float32))
        return (w, b, gamma, beta, rmean, rvar)

    k1, k2, k3, kfc = jax.random.split(key, 4)
    p1 = conv_bn(k1, 1, 8)
    p2 = conv_bn(k2, 8, 16)
    p3 = conv_bn(k3, 16, 64)
    kw, kb = jax.random.split(kfc)
    wfc = jax.random.normal(kw, (8, 64), jnp.float32) / 8.0   # Linear: (out, in)
    bfc = 0.1 * jax.random.normal(kb, (8,), jnp.float32)
    return p1 + p2 + p3 + (wfc, bfc)


def fold_params(torch_params):
    """Fold eval-mode BN into conv weights, build banded conv matrices, pack biases."""
    (w1, b1, g1, be1, rm1, rv1,
     w2, b2, g2, be2, rm2, rv2,
     w3, b3, g3, be3, rm3, rv3, wfc, bfc) = torch_params

    def fold(w, b, g, be, rm, rv):
        scale = g * jax.lax.rsqrt(rv + _EPS)
        shift = be - rm * scale
        wk = jnp.transpose(w, (2, 1, 0)) * scale[None, None, :]   # (2, Cin, Cout)
        bk = b * scale + shift                                    # (Cout,)
        return wk, bk

    w1k, b1k = fold(w1, b1, g1, be1, rm1, rv1)   # (2, 1, 8),   (8,)
    w2k, b2k = fold(w2, b2, g2, be2, rm2, rv2)   # (2, 8, 16),  (16,)
    w3k, b3k = fold(w3, b3, g3, be3, rm3, rv3)   # (2, 16, 64), (64,)

    def banded(wk, out_positions, n_in_pos):
        # Banded block matrix: row block r = conv output position out_positions[r]
        # (Cout rows), with tap0 at input position l and tap1 at l+1.
        cin, cout = wk.shape[1], wk.shape[2]
        t0, t1 = wk[0].T, wk[1].T                      # (Cout, Cin)
        W = jnp.zeros((len(out_positions) * cout, n_in_pos * cin), jnp.float32)
        for r, l in enumerate(out_positions):
            W = W.at[r * cout:(r + 1) * cout, l * cin:(l + 1) * cin].set(t0)
            W = W.at[r * cout:(r + 1) * cout, (l + 1) * cin:(l + 2) * cin].set(t1)
        return W

    # Row order = [even pool positions..., odd pool positions...] so MaxPool(2)
    # is max(top_half, bottom_half) in the kernel (no reshape needed).
    w1b = banded(w1k, [0, 2, 4, 6, 8, 10, 12, 1, 3, 5, 7, 9, 11, 13], 16)  # (112, 16)
    w2b = banded(w2k, [0, 2, 4, 1, 3, 5], 7)                               # (96, 56)
    w3b = banded(w3k, [0, 1], 3)                                           # (128, 48)

    bias = jnp.zeros((128, 4), jnp.float32)
    bias = bias.at[0:112, 0].set(jnp.tile(b1k, 14))
    bias = bias.at[0:96, 1].set(jnp.tile(b2k, 6))
    bias = bias.at[0:128, 2].set(jnp.tile(b3k, 2))
    bias = bias.at[0:8, 3].set(bfc)
    return w1b, w2b, w3b, wfc, bias


# --------------------------------------------------------------------------
# Pure-JAX reference (un-folded BN math, independent pooling impl)
# --------------------------------------------------------------------------
def ref_forward(x_ncl, torch_params):
    (w1, b1, g1, be1, rm1, rv1,
     w2, b2, g2, be2, rm2, rv2,
     w3, b3, g3, be3, rm3, rv3, wfc, bfc) = torch_params
    hi = jax.lax.Precision.HIGHEST
    x = jnp.transpose(x_ncl, (0, 2, 1))               # (N, L, C)

    def layer(x, w, b, g, be, rm, rv):
        wk = jnp.transpose(w, (2, 1, 0))              # (2, Cin, Cout)
        y = (jnp.einsum('nlc,co->nlo', x[:, :-1, :], wk[0], precision=hi)
             + jnp.einsum('nlc,co->nlo', x[:, 1:, :], wk[1], precision=hi)
             + b[None, None, :])
        y = (y - rm) * jax.lax.rsqrt(rv + _EPS) * g + be
        y = jnp.maximum(y, 0.0)
        n_, l_, c_ = y.shape
        l2 = (l_ // 2) * 2
        return y[:, :l2, :].reshape(n_, l_ // 2, 2, c_).max(axis=2)

    h = layer(x, w1, b1, g1, be1, rm1, rv1)
    h = layer(h, w2, b2, g2, be2, rm2, rv2)
    h = layer(h, w3, b3, g3, be3, rm3, rv3)
    return jnp.einsum('nc,oc->no', h[:, 0, :], wfc, precision=hi) + bfc


if __name__ == "__main__":
    key = jax.random.PRNGKey(0)
    kx, kp = jax.random.split(key)
    # Input implied by the module: (N, 1, 16) so length collapses to 1 before
    # the Linear(64*1, 8) head.
    x = jax.random.normal(kx, (2, 1, 16), jnp.float32)
    torch_params = init_torch_params(kp)
    kernel_params = fold_params(torch_params)

    out = jax.block_until_ready(cnnd_forward(x, kernel_params))
    ref = ref_forward(x, torch_params)

    assert out.shape == (2, 8), out.shape
    # Kernel uses default MXU precision, reference uses HIGHEST -> 1e-3 tol.
    assert jnp.allclose(out, ref, atol=1e-3, rtol=1e-3), (out, ref)
    print("KERNEL_OK")
</pallas_src>

<mosaic_0001>
module attributes {stable_mosaic.version = 11 : i64} {
  func.func @cnnd_kernel(%arg0: i32, %arg1: memref<16x128xf32, #tpu.memory_space<vmem>>, %arg2: memref<112x16xf32, #tpu.memory_space<vmem>>, %arg3: memref<96x56xf32, #tpu.memory_space<vmem>>, %arg4: memref<128x48xf32, #tpu.memory_space<vmem>>, %arg5: memref<8x64xf32, #tpu.memory_space<vmem>>, %arg6: memref<128x4xf32, #tpu.memory_space<vmem>>, %arg7: memref<8x128xf32, #tpu.memory_space<vmem>>) attributes {dimension_semantics = [#tpu.dimension_semantics<parallel>], iteration_bounds = array<i64: 1>, scalar_prefetch = 0 : i64, scratch_operands = 0 : i64, tpu.core_type = #tpu.core_type<tc>, window_params = [{transform_indices = @transform_0, window_bounds = array<i64: 16, 128>}, {pipeline_mode = #tpu.pipeline_mode<synchronous>, transform_indices = @transform_1, window_bounds = array<i64: 112, 16>}, {pipeline_mode = #tpu.pipeline_mode<synchronous>, transform_indices = @transform_2, window_bounds = array<i64: 96, 56>}, {pipeline_mode = #tpu.pipeline_mode<synchronous>, transform_indices = @transform_3, window_bounds = array<i64: 128, 48>}, {pipeline_mode = #tpu.pipeline_mode<synchronous>, transform_indices = @transform_4, window_bounds = array<i64: 8, 64>}, {pipeline_mode = #tpu.pipeline_mode<synchronous>, transform_indices = @transform_5, window_bounds = array<i64: 128, 4>}, {transform_indices = @transform_6, window_bounds = array<i64: 8, 128>}]} {
    %c0 = arith.constant 0 : index
    %c0_0 = arith.constant 0 : index
    %0 = vector.load %arg1[%c0, %c0_0] : memref<16x128xf32, #tpu.memory_space<vmem>>, vector<16x128xf32>
    %c0_1 = arith.constant 0 : index
    %c0_2 = arith.constant 0 : index
    %1 = vector.load %arg2[%c0_1, %c0_2] : memref<112x16xf32, #tpu.memory_space<vmem>>, vector<112x16xf32>
    %cst = arith.constant dense<0.000000e+00> : vector<112x128xf32>
    %2 = tpu.matmul %1, %0, %cst {dimension_numbers = #tpu.dot_dimension_numbers<[1], [0], [0], [1], [0, 0, 1, 1], [], []>} : vector<112x16xf32>, vector<16x128xf32>, vector<112x128xf32> -> vector<112x128xf32>
    %c0_3 = arith.constant 0 : index
    %c0_4 = arith.constant 0 : index
    %3 = vector.load %arg6[%c0_3, %c0_4] : memref<128x4xf32, #tpu.memory_space<vmem>>, vector<112x1xf32>
    %4 = vector.broadcast %3 : vector<112x1xf32> to vector<112x128xf32>
    %5 = arith.addf %2, %4 : vector<112x128xf32>
    %cst_5 = arith.constant 0.000000e+00 : f32
    %6 = vector.broadcast %cst_5 : f32 to vector<112x128xf32>
    %7 = arith.maximumf %5, %6 : vector<112x128xf32>
    %8 = vector.extract_strided_slice %7 {offsets = [0, 0], sizes = [56, 128], strides = [1, 1]} : vector<112x128xf32> to vector<56x128xf32>
    %9 = vector.extract_strided_slice %7 {offsets = [56, 0], sizes = [56, 128], strides = [1, 1]} : vector<112x128xf32> to vector<56x128xf32>
    %10 = arith.maximumf %8, %9 : vector<56x128xf32>
    %c0_6 = arith.constant 0 : index
    %c0_7 = arith.constant 0 : index
    %11 = vector.load %arg3[%c0_6, %c0_7] : memref<96x56xf32, #tpu.memory_space<vmem>>, vector<96x56xf32>
    %cst_8 = arith.constant dense<0.000000e+00> : vector<96x128xf32>
    %12 = tpu.matmul %11, %10, %cst_8 {dimension_numbers = #tpu.dot_dimension_numbers<[1], [0], [0], [1], [0, 0, 1, 1], [], []>} : vector<96x56xf32>, vector<56x128xf32>, vector<96x128xf32> -> vector<96x128xf32>
    %c0_9 = arith.constant 0 : index
    %c1 = arith.constant 1 : index
    %13 = vector.load %arg6[%c0_9, %c1] : memref<128x4xf32, #tpu.memory_space<vmem>>, vector<96x1xf32>
    %14 = vector.broadcast %13 : vector<96x1xf32> to vector<96x128xf32>
    %15 = arith.addf %12, %14 : vector<96x128xf32>
    %cst_10 = arith.constant 0.000000e+00 : f32
    %16 = vector.broadcast %cst_10 : f32 to vector<96x128xf32>
    %17 = arith.maximumf %15, %16 : vector<96x128xf32>
    %18 = vector.extract_strided_slice %17 {offsets = [0, 0], sizes = [48, 128], strides = [1, 1]} : vector<96x128xf32> to vector<48x128xf32>
    %19 = vector.extract_strided_slice %17 {offsets = [48, 0], sizes = [48, 128], strides = [1, 1]} : vector<96x128xf32> to vector<48x128xf32>
    %20 = arith.maximumf %18, %19 : vector<48x128xf32>
    %c0_11 = arith.constant 0 : index
    %c0_12 = arith.constant 0 : index
    %21 = vector.load %arg4[%c0_11, %c0_12] : memref<128x48xf32, #tpu.memory_space<vmem>>, vector<128x48xf32>
    %cst_13 = arith.constant dense<0.000000e+00> : vector<128x128xf32>
    %22 = tpu.matmul %21, %20, %cst_13 {dimension_numbers = #tpu.dot_dimension_numbers<[1], [0], [0], [1], [0, 0, 1, 1], [], []>} : vector<128x48xf32>, vector<48x128xf32>, vector<128x128xf32> -> vector<128x128xf32>
    %c0_14 = arith.constant 0 : index
    %c2 = arith.constant 2 : index
    %23 = vector.load %arg6[%c0_14, %c2] : memref<128x4xf32, #tpu.memory_space<vmem>>, vector<128x1xf32>
    %24 = vector.broadcast %23 : vector<128x1xf32> to vector<128x128xf32>
    %25 = arith.addf %22, %24 : vector<128x128xf32>
    %cst_15 = arith.constant 0.000000e+00 : f32
    %26 = vector.broadcast %cst_15 : f32 to vector<128x128xf32>
    %27 = arith.maximumf %25, %26 : vector<128x128xf32>
    %28 = vector.extract_strided_slice %27 {offsets = [0, 0], sizes = [64, 128], strides = [1, 1]} : vector<128x128xf32> to vector<64x128xf32>
    %29 = vector.extract_strided_slice %27 {offsets = [64, 0], sizes = [64, 128], strides = [1, 1]} : vector<128x128xf32> to vector<64x128xf32>
    %30 = arith.maximumf %28, %29 : vector<64x128xf32>
    %c0_16 = arith.constant 0 : index
    %c0_17 = arith.constant 0 : index
    %31 = vector.load %arg5[%c0_16, %c0_17] : memref<8x64xf32, #tpu.memory_space<vmem>>, vector<8x64xf32>
    %cst_18 = arith.constant dense<0.000000e+00> : vector<8x128xf32>
    %32 = tpu.matmul %31, %30, %cst_18 {dimension_numbers = #tpu.dot_dimension_numbers<[1], [0], [0], [1], [0, 0, 1, 1], [], []>} : vector<8x64xf32>, vector<64x128xf32>, vector<8x128xf32> -> vector<8x128xf32>
    %c0_19 = arith.constant 0 : index
    %c3 = arith.constant 3 : index
    %33 = vector.load %arg6[%c0_19, %c3] : memref<128x4xf32, #tpu.memory_space<vmem>>, vector<8x1xf32>
    %34 = vector.broadcast %33 : vector<8x1xf32> to vector<8x128xf32>
    %35 = arith.addf %32, %34 : vector<8x128xf32>
    %c0_20 = arith.constant 0 : index
    %c0_21 = arith.constant 0 : index
    %36 = vector.load %arg7[%c0_20, %c0_21] : memref<8x128xf32, #tpu.memory_space<vmem>>, vector<8x128xf32>
    tpu.vector_store %arg7[%c0_20, %c0_21], %35 {strides = array<i32>} : memref<8x128xf32, #tpu.memory_space<vmem>>, vector<8x128xf32>,
    return
  }
  func.func @transform_0(%arg0: i32) -> (i32, i32) {
    %c0_i32 = arith.constant 0 : i32
    %c0_i32_0 = arith.constant 0 : i32
    return %c0_i32, %arg0 : i32, i32
  }
  func.func @transform_1(%arg0: i32) -> (i32, i32) {
    %c0_i32 = arith.constant 0 : i32
    %c0_i32_0 = arith.constant 0 : i32
    %c0_i32_1 = arith.constant 0 : i32
    return %c0_i32, %c0_i32_0 : i32, i32
  }
  func.func @transform_2(%arg0: i32) -> (i32, i32) {
    %c0_i32 = arith.constant 0 : i32
    %c0_i32_0 = arith.constant 0 : i32
    %c0_i32_1 = arith.constant 0 : i32
    return %c0_i32, %c0_i32_0 : i32, i32
  }
  func.func @transform_3(%arg0: i32) -> (i32, i32) {
    %c0_i32 = arith.constant 0 : i32
    %c0_i32_0 = arith.constant 0 : i32
    %c0_i32_1 = arith.constant 0 : i32
    return %c0_i32, %c0_i32_0 : i32, i32
  }
  func.func @transform_4(%arg0: i32) -> (i32, i32) {
    %c0_i32 = arith.constant 0 : i32
    %c0_i32_0 = arith.constant 0 : i32
    %c0_i32_1 = arith.constant 0 : i32
    return %c0_i32, %c0_i32_0 : i32, i32
  }
  func.func @transform_5(%arg0: i32) -> (i32, i32) {
    %c0_i32 = arith.constant 0 : i32
    %c0_i32_0 = arith.constant 0 : i32
    %c0_i32_1 = arith.constant 0 : i32
    return %c0_i32, %c0_i32_0 : i32, i32
  }
  func.func @transform_6(%arg0: i32) -> (i32, i32) {
    %c0_i32 = arith.constant 0 : i32
    %c0_i32_0 = arith.constant 0 : i32
    return %c0_i32, %arg0 : i32, i32
  }
}

</mosaic_0001>

<llo_original>
// kernel: tpu_custom_call.1
$region0: #{tpu_custom_call.1}
  #allocation0 [shape = 'u32[]', space=smem, size = 0x4, offset = 0x4, fixed_abs, tag = 'smem constant byte address 0x4 - core index']
  #allocation1 [shape = 'u32[144,128]{1,0:T(1,128)}', space=vmem, size = 0x12000, scoped, tag = 'internal scratch']
  %s0 = inlined_call_operand.vmem [shape: f32[16,128], index: 0, kind: input, shape index: {}]
  %s1 = inlined_call_operand.vmem [shape: f32[112,16], index: 1, kind: input, shape index: {}]
  %s2 = inlined_call_operand.vmem [shape: f32[96,56], index: 2, kind: input, shape index: {}]
  %s3 = inlined_call_operand.vmem [shape: f32[128,48], index: 3, kind: input, shape index: {}]
  %s4 = inlined_call_operand.vmem [shape: f32[8,64], index: 4, kind: input, shape index: {}]
  %s5 = inlined_call_operand.vmem [shape: f32[128,4], index: 5, kind: input, shape index: {}]
  %s6 = inlined_call_operand.hbm [shape: f32[8,128], index: 6, kind: output, shape index: {}]
  %s7 = sld [smem:[#allocation0]]
  $region34: #{tpu_custom_call.1} parent=0
    _
  %s9 = ssub.s32 1, %s7
  %s10 = scalar_select 0, %s9, %s7
  $region1: #{tpu_custom_call.1} parent=0
    #allocation2 [shape = 'u8[4096]{0}', space=vmem, size = 0x1000, scoped, tag = 'output window, operand 0, single buffered']
    #allocation3 [shape = 's32[1]{0}', space=sflag, size = 0x4, scoped, tag = 'scoped memory for tpu_custom_call.1']
    %11 = vsyncpa [#allocation3], 0
    // Predicated region
    $region2: #{tpu_custom_call.1} parent=1 // pred_check
      _
    $region3: #{tpu_custom_call.1} parent=1 // pred_check_branch
      %13 = sbr.rel (0) target = $region5
    $region4: #{tpu_custom_call.1} parent=1 // pred_region
      _
    $region5: #{tpu_custom_call.1} parent=1 // pred_fallthru
      _
    // Predicated region
    $region6: #{tpu_custom_call.1} parent=1 // pred_check
      _
    $region7: #{tpu_custom_call.1} parent=1 // pred_check_branch
      %15 = sbr.rel (0) target = $region9
    $region8: #{tpu_custom_call.1} parent=1 // pred_region
      _
    $region9: #{tpu_custom_call.1} parent=1 // pred_fallthru
      _
    // Predicated region
    $region10: #{tpu_custom_call.1} parent=1 // pred_check
      _
    $region11: #{tpu_custom_call.1} parent=1 // pred_check_branch
      %17 = sbr.rel (0) target = $region13
    $region12: #{tpu_custom_call.1} parent=1 // pred_region
      _
    $region13: #{tpu_custom_call.1} parent=1 // pred_fallthru
      _
    // Predicated region
    $region14: #{tpu_custom_call.1} parent=1 // pred_check
      _
    $region15: #{tpu_custom_call.1} parent=1 // pred_check_branch
      %19 = sbr.rel (0) target = $region17
    $region16: #{tpu_custom_call.1} parent=1 // pred_region
      _
    $region17: #{tpu_custom_call.1} parent=1 // pred_fallthru
      _
    // Predicated region
    $region18: #{tpu_custom_call.1} parent=1 // pred_check
      _
    $region19: #{tpu_custom_call.1} parent=1 // pred_check_branch
      %21 = sbr.rel (0) target = $region21
    $region20: #{tpu_custom_call.1} parent=1 // pred_region
      _
    $region21: #{tpu_custom_call.1} parent=1 // pred_fallthru
      _
    // Predicated region
    $region22: #{tpu_custom_call.1} parent=1 // pred_check
      _
    $region23: #{tpu_custom_call.1} parent=1 // pred_check_branch
      %23 = sbr.rel (0) target = $region25
    $region24: #{tpu_custom_call.1} parent=1 // pred_region
      _
    $region25: #{tpu_custom_call.1} parent=1 // pred_fallthru
      _
    %v24 = vld [vmem:[%s0] sm:$0xff]
    %v25 = vld [vmem:[%s0 + $0x8] sm:$0xff]
    %v26 = vld [vmem:[%s1] sm:$0xff]
    %v27 = vld [vmem:[%s1 + $0x8] sm:$0xff]
    %v28 = vld [vmem:[%s1 + $0x10] sm:$0xff]
    %v29 = vld [vmem:[%s1 + $0x18] sm:$0xff]
    %v30 = vld [vmem:[%s1 + $0x20] sm:$0xff]
    %v31 = vld [vmem:[%s1 + $0x28] sm:$0xff]
    %v32 = vld [vmem:[%s1 + $0x30] sm:$0xff]
    %v33 = vld [vmem:[%s1 + $0x38] sm:$0xff]
    %v34 = vld [vmem:[%s1 + $0x40] sm:$0xff]
    %v35 = vld [vmem:[%s1 + $0x48] sm:$0xff]
    %v36 = vld [vmem:[%s1 + $0x50] sm:$0xff]
    %v37 = vld [vmem:[%s1 + $0x58] sm:$0xff]
    %v38 = vld [vmem:[%s1 + $0x60] sm:$0xff]
    %v39 = vld [vmem:[%s1 + $0x68] sm:$0xff]
    %v40 = vld [vmem:[%s5] sm:$0xff]
    %v41 = vld [vmem:[%s5 + $0x8] sm:$0xff]
    %v42 = vld [vmem:[%s5 + $0x10] sm:$0xff]
    %v43 = vld [vmem:[%s5 + $0x18] sm:$0xff]
    %v44 = vld [vmem:[%s5 + $0x20] sm:$0xff]
    %v45 = vld [vmem:[%s5 + $0x28] sm:$0xff]
    %v46 = vld [vmem:[%s5 + $0x30] sm:$0xff]
    %v47 = vld [vmem:[%s5 + $0x38] sm:$0xff]
    %v48 = vld [vmem:[%s5 + $0x40] sm:$0xff]
    %v49 = vld [vmem:[%s5 + $0x48] sm:$0xff]
    %v50 = vld [vmem:[%s5 + $0x50] sm:$0xff]
    %v51 = vld [vmem:[%s5 + $0x58] sm:$0xff]
    %v52 = vld [vmem:[%s5 + $0x60] sm:$0xff]
    %v53 = vld [vmem:[%s5 + $0x68] sm:$0xff]
    %55 = vset.pattern.permute.xlu0 0
    %56 = vperm.xlu0 %55, %v40
    %v57 = vpop.permute.xlu0 %56
    %60 = vset.pattern.permute.xlu0 0
    %61 = vperm.xlu0 %60, %v41
    %v62 = vpop.permute.xlu0 %61
    %65 = vset.pattern.permute.xlu0 0
    %66 = vperm.xlu0 %65, %v42
    %v67 = vpop.permute.xlu0 %66
    %70 = vset.pattern.permute.xlu0 0
    %71 = vperm.xlu0 %70, %v43
    %v72 = vpop.permute.xlu0 %71
    %75 = vset.pattern.permute.xlu0 0
    %76 = vperm.xlu0 %75, %v44
    %v77 = vpop.permute.xlu0 %76
    %80 = vset.pattern.permute.xlu0 0
    %81 = vperm.xlu0 %80, %v45
    %v82 = vpop.permute.xlu0 %81
    %85 = vset.pattern.permute.xlu0 0
    %86 = vperm.xlu0 %85, %v46
    %v87 = vpop.permute.xlu0 %86
    %90 = vset.pattern.permute.xlu0 0
    %91 = vperm.xlu0 %90, %v47
    %v92 = vpop.permute.xlu0 %91
    %95 = vset.pattern.permute.xlu0 0
    %96 = vperm.xlu0 %95, %v48
    %v97 = vpop.permute.xlu0 %96
    %100 = vset.pattern.permute.xlu0 0
    %101 = vperm.xlu0 %100, %v49
    %v102 = vpop.permute.xlu0 %101
    %105 = vset.pattern.permute.xlu0 0
    %106 = vperm.xlu0 %105, %v50
    %v107 = vpop.permute.xlu0 %106
    %110 = vset.pattern.permute.xlu0 0
    %111 = vperm.xlu0 %110, %v51
    %v112 = vpop.permute.xlu0 %111
    %115 = vset.pattern.permute.xlu0 0
    %116 = vperm.xlu0 %115, %v52
    %v117 = vpop.permute.xlu0 %116
    %120 = vset.pattern.permute.xlu0 0
    %121 = vperm.xlu0 %120, %v53
    %v122 = vpop.permute.xlu0 %121
    %vm124 = vcmask 130048
    %v126 = vsel %vm124, %v26, 0
    %v129 = vsel %vm124, %v27, 0
    %v132 = vsel %vm124, %v28, 0
    %v135 = vsel %vm124, %v29, 0
    %v138 = vsel %vm124, %v30, 0
    %v141 = vsel %vm124, %v31, 0
    %v144 = vsel %vm124, %v32, 0
    %v147 = vsel %vm124, %v33, 0
    %v150 = vsel %vm124, %v34, 0
    %v153 = vsel %vm124, %v35, 0
    %v156 = vsel %vm124, %v36, 0
    %v159 = vsel %vm124, %v37, 0
    %v162 = vsel %vm124, %v38, 0
    %v165 = vsel %vm124, %v39, 0
    %167 = vmatprep.subr.mxu0 0.0
    %168 = vmatpush1.msra.mxu0 %v24
    %169 = vmatprep.subr.mxu0 0.0
    %170 = vmatpush1.msra.mxu0 %v25
    %171 = vmatprep.subr.mxu0 0.0
    %172 = vmatpush1.msra.mxu0 0.0
    %173 = vmatprep.subr.mxu0 0.0
    %174 = vmatpush1.msra.mxu0 0.0
    %175 = vmatprep.subr.mxu0 0.0
    %176 = vmatpush1.msra.mxu0 0.0
    %177 = vmatprep.subr.mxu0 0.0
    %178 = vmatpush1.msra.mxu0 0.0
    %179 = vmatprep.subr.mxu0 0.0
    %180 = vmatpush1.msra.mxu0 0.0
    %181 = vmatprep.subr.mxu0 0.0
    %182 = vmatpush1.msra.mxu0 0.0
    %183 = vmatprep.subr.mxu0 0.0
    %184 = vmatpush1.msra.mxu0 0.0
    %185 = vmatprep.subr.mxu0 0.0
    %186 = vmatpush1.msra.mxu0 0.0
    %187 = vmatprep.subr.mxu0 0.0
    %188 = vmatpush1.msra.mxu0 0.0
    %189 = vmatprep.subr.mxu0 0.0
    %190 = vmatpush1.msra.mxu0 0.0
    %191 = vmatprep.subr.mxu0 0.0
    %192 = vmatpush1.msra.mxu0 0.0
    %193 = vmatprep.subr.mxu0 0.0
    %194 = vmatpush1.msra.mxu0 0.0
    %195 = vmatprep.subr.mxu0 0.0
    %196 = vmatpush1.msra.mxu0 0.0
    %197 = vmatprep.subr.mxu0 0.0
    %198 = vmatpush1.msra.mxu0 0.0
    %199 = vmatprep.subr.mxu0 0.0
    %200 = vmatpush1.msra.mxu0 0.0
    %201 = vmatprep.subr.mxu0 0.0
    %202 = vmatpush1.msra.mxu0 0.0
    %203 = vmatprep.subr.mxu0 0.0
    %204 = vmatpush1.msra.mxu0 0.0
    %205 = vmatprep.subr.mxu0 0.0
    %206 = vmatpush1.msra.mxu0 0.0
    %207 = vmatprep.subr.mxu0 0.0
    %208 = vmatpush1.msra.mxu0 0.0
    %209 = vmatprep.subr.mxu0 0.0
    %210 = vmatpush1.msra.mxu0 0.0
    %211 = vmatprep.subr.mxu0 0.0
    %212 = vmatpush1.msra.mxu0 0.0
    %213 = vmatprep.subr.mxu0 0.0
    %214 = vmatpush1.msra.mxu0 0.0
    %215 = vmatprep.subr.mxu0 0.0
    %216 = vmatpush1.msra.mxu0 0.0
    %217 = vmatprep.subr.mxu0 0.0
    %218 = vmatpush1.msra.mxu0 0.0
    %219 = vmatprep.subr.mxu0 0.0
    %220 = vmatpush1.msra.mxu0 0.0
    %221 = vmatprep.subr.mxu0 0.0
    %222 = vmatpush1.msra.mxu0 0.0
    %223 = vmatprep.subr.mxu0 0.0
    %224 = vmatpush1.msra.mxu0 0.0
    %225 = vmatprep.subr.mxu0 0.0
    %226 = vmatpush1.msra.mxu0 0.0
    %227 = vmatprep.subr.mxu0 0.0
    %228 = vmatpush1.msra.mxu0 0.0
    %229 = vmatprep.subr.mxu0 0.0
    %230 = vmatpush1.msra.mxu0 0.0
    %231 = vmatprep.mubr.f32.mxu0 0.0
    %232 = vmatmul.mubr.f32.gmra.mrb[0].mxu0 %v126
    %v233 = vpop.f32.mrb[0].mxu0
    %v234 = vadd.f32 %v57, %v233
    %v235 = vpop.f32.mrb[0].mxu0
    %236 = vmatprep.mubr.f32.mxu0 0.0
    %237 = vmatmul.mubr.f32.gmra.mrb[0].mxu0 %v129
    %v238 = vpop.f32.mrb[0].mxu0
    %v239 = vadd.f32 %v62, %v238
    %v240 = vpop.f32.mrb[0].mxu0
    %241 = vmatprep.mubr.f32.mxu0 0.0
    %242 = vmatmul.mubr.f32.gmra.mrb[0].mxu0 %v132
    %v243 = vpop.f32.mrb[0].mxu0
    %v244 = vadd.f32 %v67, %v243
    %v245 = vpop.f32.mrb[0].mxu0
    %246 = vmatprep.mubr.f32.mxu0 0.0
    %247 = vmatmul.mubr.f32.gmra.mrb[0].mxu0 %v135
    %v248 = vpop.f32.mrb[0].mxu0
    %v249 = vadd.f32 %v72, %v248
    %v250 = vpop.f32.mrb[0].mxu0
    %251 = vmatprep.mubr.f32.mxu0 0.0
    %252 = vmatmul.mubr.f32.gmra.mrb[0].mxu0 %v138
    %v253 = vpop.f32.mrb[0].mxu0
    %v254 = vadd.f32 %v77, %v253
    %v255 = vpop.f32.mrb[0].mxu0
    %256 = vmatprep.mubr.f32.mxu0 0.0
    %257 = vmatmul.mubr.f32.gmra.mrb[0].mxu0 %v141
    %v258 = vpop.f32.mrb[0].mxu0
    %v259 = vadd.f32 %v82, %v258
    %v260 = vpop.f32.mrb[0].mxu0
    %261 = vmatprep.mubr.f32.mxu0 0.0
    %262 = vmatmul.mubr.f32.gmra.mrb[0].mxu0 %v144
    %v263 = vpop.f32.mrb[0].mxu0
    %v264 = vadd.f32 %v87, %v263
    %v265 = vpop.f32.mrb[0].mxu0
    %266 = vmatprep.mubr.f32.mxu0 0.0
    %267 = vmatmul.mubr.f32.gmra.mrb[0].mxu0 %v147
    %v268 = vpop.f32.mrb[0].mxu0
    %v269 = vadd.f32 %v92, %v268
    %v270 = vpop.f32.mrb[0].mxu0
    %271 = vmatprep.mubr.f32.mxu0 0.0
    %272 = vmatmul.mubr.f32.gmra.mrb[0].mxu0 %v150
    %v273 = vpop.f32.mrb[0].mxu0
    %v274 = vadd.f32 %v97, %v273
    %v275 = vpop.f32.mrb[0].mxu0
    %276 = vmatprep.mubr.f32.mxu0 0.0
    %277 = vmatmul.mubr.f32.gmra.mrb[0].mxu0 %v153
    %v278 = vpop.f32.mrb[0].mxu0
    %v279 = vadd.f32 %v102, %v278
    %v280 = vpop.f32.mrb[0].mxu0
    %281 = vmatprep.mubr.f32.mxu0 0.0
    %282 = vmatmul.mubr.f32.gmra.mrb[0].mxu0 %v156
    %v283 = vpop.f32.mrb[0].mxu0
    %v284 = vadd.f32 %v107, %v283
    %v285 = vpop.f32.mrb[0].mxu0
    %286 = vmatprep.mubr.f32.mxu0 0.0
    %287 = vmatmul.mubr.f32.gmra.mrb[0].mxu0 %v159
    %v288 = vpop.f32.mrb[0].mxu0
    %v289 = vadd.f32 %v112, %v288
    %v290 = vpop.f32.mrb[0].mxu0
    %291 = vmatprep.mubr.f32.mxu0 0.0
    %292 = vmatmul.mubr.f32.gmra.mrb[0].mxu0 %v162
    %v293 = vpop.f32.mrb[0].mxu0
    %v294 = vadd.f32 %v117, %v293
    %v295 = vpop.f32.mrb[0].mxu0
    %296 = vmatprep.mubr.f32.mxu0 0.0
    %297 = vmatmul.mubr.f32.gmra.mrb[0].mxu0 %v165
    %v298 = vpop.f32.mrb[0].mxu0
    %v299 = vadd.f32 %v122, %v298
    %v300 = vpop.f32.mrb[0].mxu0
    %301 = vdwg.mxu0
    %v302 = vmax.f32 %v234, 0.0
    %v303 = vmax.f32 %v239, 0.0
    %v304 = vmax.f32 %v244, 0.0
    %v305 = vmax.f32 %v249, 0.0
    %v306 = vmax.f32 %v254, 0.0
    %v307 = vmax.f32 %v259, 0.0
    %v308 = vmax.f32 %v264, 0.0
    %v309 = vmax.f32 %v269, 0.0
    %v310 = vmax.f32 %v274, 0.0
    %v311 = vmax.f32 %v279, 0.0
    %v312 = vmax.f32 %v284, 0.0
    %v313 = vmax.f32 %v289, 0.0
    %v314 = vmax.f32 %v294, 0.0
    %v315 = vmax.f32 %v299, 0.0
    %v316 = vmax.f32 %v302, %v309
    %v317 = vmax.f32 %v303, %v310
    %v318 = vmax.f32 %v304, %v311
    %v319 = vmax.f32 %v305, %v312
    %v320 = vmax.f32 %v306, %v313
    %v321 = vmax.f32 %v307, %v314
    %v322 = vmax.f32 %v308, %v315
    %v323 = vld [vmem:[%s2] sm:$0xff]
    %v324 = vld [vmem:[%s2 + $0x8] sm:$0xff]
    %v325 = vld [vmem:[%s2 + $0x10] sm:$0xff]
    %v326 = vld [vmem:[%s2 + $0x18] sm:$0xff]
    %v327 = vld [vmem:[%s2 + $0x20] sm:$0xff]
    %v328 = vld [vmem:[%s2 + $0x28] sm:$0xff]
    %v329 = vld [vmem:[%s2 + $0x30] sm:$0xff]
    %v330 = vld [vmem:[%s2 + $0x38] sm:$0xff]
    %v331 = vld [vmem:[%s2 + $0x40] sm:$0xff]
    %v332 = vld [vmem:[%s2 + $0x48] sm:$0xff]
    %v333 = vld [vmem:[%s2 + $0x50] sm:$0xff]
    %v334 = vld [vmem:[%s2 + $0x58] sm:$0xff]
    %v335 = vld [vmem:[%s5] sm:$0xff]
    %v336 = vld [vmem:[%s5 + $0x8] sm:$0xff]
    %v337 = vld [vmem:[%s5 + $0x10] sm:$0xff]
    %v338 = vld [vmem:[%s5 + $0x18] sm:$0xff]
    %v339 = vld [vmem:[%s5 + $0x20] sm:$0xff]
    %v340 = vld [vmem:[%s5 + $0x28] sm:$0xff]
    %v341 = vld [vmem:[%s5 + $0x30] sm:$0xff]
    %v342 = vld [vmem:[%s5 + $0x38] sm:$0xff]
    %v343 = vld [vmem:[%s5 + $0x40] sm:$0xff]
    %v344 = vld [vmem:[%s5 + $0x48] sm:$0xff]
    %v345 = vld [vmem:[%s5 + $0x50] sm:$0xff]
    %v346 = vld [vmem:[%s5 + $0x58] sm:$0xff]
    %348 = vset.pattern.permute.xlu0 1
    %349 = vperm.xlu0 %348, %v335
    %v350 = vpop.permute.xlu0 %349
    %353 = vset.pattern.permute.xlu0 1
    %354 = vperm.xlu0 %353, %v336
    %v355 = vpop.permute.xlu0 %354
    %358 = vset.pattern.permute.xlu0 1
    %359 = vperm.xlu0 %358, %v337
    %v360 = vpop.permute.xlu0 %359
    %363 = vset.pattern.permute.xlu0 1
    %364 = vperm.xlu0 %363, %v338
    %v365 = vpop.permute.xlu0 %364
    %368 = vset.pattern.permute.xlu0 1
    %369 = vperm.xlu0 %368, %v339
    %v370 = vpop.permute.xlu0 %369
    %373 = vset.pattern.permute.xlu0 1
    %374 = vperm.xlu0 %373, %v340
    %v375 = vpop.permute.xlu0 %374
    %378 = vset.pattern.permute.xlu0 1
    %379 = vperm.xlu0 %378, %v341
    %v380 = vpop.permute.xlu0 %379
    %383 = vset.pattern.permute.xlu0 1
    %384 = vperm.xlu0 %383, %v342
    %v385 = vpop.permute.xlu0 %384
    %388 = vset.pattern.permute.xlu0 1
    %389 = vperm.xlu0 %388, %v343
    %v390 = vpop.permute.xlu0 %389
    %393 = vset.pattern.permute.xlu0 1
    %394 = vperm.xlu0 %393, %v344
    %v395 = vpop.permute.xlu0 %394
    %398 = vset.pattern.permute.xlu0 1
    %399 = vperm.xlu0 %398, %v345
    %v400 = vpop.permute.xlu0 %399
    %403 = vset.pattern.permute.xlu0 1
    %404 = vperm.xlu0 %403, %v346
    %v405 = vpop.permute.xlu0 %404
    %vm407 = vcmask 457728
    %v409 = vsel %vm407, %v323, 0
    %v412 = vsel %vm407, %v324, 0
    %v415 = vsel %vm407, %v325, 0
    %v418 = vsel %vm407, %v326, 0
    %v421 = vsel %vm407, %v327, 0
    %v424 = vsel %vm407, %v328, 0
    %v427 = vsel %vm407, %v329, 0
    %v430 = vsel %vm407, %v330, 0
    %v433 = vsel %vm407, %v331, 0
    %v436 = vsel %vm407, %v332, 0
    %v439 = vsel %vm407, %v333, 0
    %v442 = vsel %vm407, %v334, 0
    %444 = vmatprep.subr.mxu0 0.0
    %445 = vmatpush1.msra.mxu0 %v316
    %446 = vmatprep.subr.mxu0 0.0
    %447 = vmatpush1.msra.mxu0 %v317
    %448 = vmatprep.subr.mxu0 0.0
    %449 = vmatpush1.msra.mxu0 %v318
    %450 = vmatprep.subr.mxu0 0.0
    %451 = vmatpush1.msra.mxu0 %v319
    %452 = vmatprep.subr.mxu0 0.0
    %453 = vmatpush1.msra.mxu0 %v320
    %454 = vmatprep.subr.mxu0 0.0
    %455 = vmatpush1.msra.mxu0 %v321
    %456 = vmatprep.subr.mxu0 0.0
    %457 = vmatpush1.msra.mxu0 %v322
    %458 = vmatprep.subr.mxu0 0.0
    %459 = vmatpush1.msra.mxu0 0.0
    %460 = vmatprep.subr.mxu0 0.0
    %461 = vmatpush1.msra.mxu0 0.0
    %462 = vmatprep.subr.mxu0 0.0
    %463 = vmatpush1.msra.mxu0 0.0
    %464 = vmatprep.subr.mxu0 0.0
    %465 = vmatpush1.msra.mxu0 0.0
    %466 = vmatprep.subr.mxu0 0.0
    %467 = vmatpush1.msra.mxu0 0.0
    %468 = vmatprep.subr.mxu0 0.0
    %469 = vmatpush1.msra.mxu0 0.0
    %470 = vmatprep.subr.mxu0 0.0
    %471 = vmatpush1.msra.mxu0 0.0
    %472 = vmatprep.subr.mxu0 0.0
    %473 = vmatpush1.msra.mxu0 0.0
    %474 = vmatprep.subr.mxu0 0.0
    %475 = vmatpush1.msra.mxu0 0.0
    %476 = vmatprep.subr.mxu0 0.0
    %477 = vmatpush1.msra.mxu0 0.0
    %478 = vmatprep.subr.mxu0 0.0
    %479 = vmatpush1.msra.mxu0 0.0
    %480 = vmatprep.subr.mxu0 0.0
    %481 = vmatpush1.msra.mxu0 0.0
    %482 = vmatprep.subr.mxu0 0.0
    %483 = vmatpush1.msra.mxu0 0.0
    %484 = vmatprep.subr.mxu0 0.0
    %485 = vmatpush1.msra.mxu0 0.0
    %486 = vmatprep.subr.mxu0 0.0
    %487 = vmatpush1.msra.mxu0 0.0
    %488 = vmatprep.subr.mxu0 0.0
    %489 = vmatpush1.msra.mxu0 0.0
    %490 = vmatprep.subr.mxu0 0.0
    %491 = vmatpush1.msra.mxu0 0.0
    %492 = vmatprep.subr.mxu0 0.0
    %493 = vmatpush1.msra.mxu0 0.0
    %494 = vmatprep.subr.mxu0 0.0
    %495 = vmatpush1.msra.mxu0 0.0
    %496 = vmatprep.subr.mxu0 0.0
    %497 = vmatpush1.msra.mxu0 0.0
    %498 = vmatprep.subr.mxu0 0.0
    %499 = vmatpush1.msra.mxu0 0.0
    %500 = vmatprep.subr.mxu0 0.0
    %501 = vmatpush1.msra.mxu0 0.0
    %502 = vmatprep.subr.mxu0 0.0
    %503 = vmatpush1.msra.mxu0 0.0
    %504 = vmatprep.subr.mxu0 0.0
    %505 = vmatpush1.msra.mxu0 0.0
    %506 = vmatprep.subr.mxu0 0.0
    %507 = vmatpush1.msra.mxu0 0.0
    %508 = vmatprep.mubr.f32.mxu0 0.0
    %509 = vmatmul.mubr.f32.gmra.mrb[0].mxu0 %v409
    %v510 = vpop.f32.mrb[0].mxu0
    %v511 = vadd.f32 %v350, %v510
    %v512 = vpop.f32.mrb[0].mxu0
    %513 = vmatprep.mubr.f32.mxu0 0.0
    %514 = vmatmul.mubr.f32.gmra.mrb[0].mxu0 %v412
    %v515 = vpop.f32.mrb[0].mxu0
    %v516 = vadd.f32 %v355, %v515
    %v517 = vpop.f32.mrb[0].mxu0
    %518 = vmatprep.mubr.f32.mxu0 0.0
    %519 = vmatmul.mubr.f32.gmra.mrb[0].mxu0 %v415
    %v520 = vpop.f32.mrb[0].mxu0
    %v521 = vadd.f32 %v360, %v520
    %v522 = vpop.f32.mrb[0].mxu0
    %523 = vmatprep.mubr.f32.mxu0 0.0
    %524 = vmatmul.mubr.f32.gmra.mrb[0].mxu0 %v418
    %v525 = vpop.f32.mrb[0].mxu0
    %v526 = vadd.f32 %v365, %v525
    %v527 = vpop.f32.mrb[0].mxu0
    %528 = vmatprep.mubr.f32.mxu0 0.0
    %529 = vmatmul.mubr.f32.gmra.mrb[0].mxu0 %v421
    %v530 = vpop.f32.mrb[0].mxu0
    %v531 = vadd.f32 %v370, %v530
    %v532 = vpop.f32.mrb[0].mxu0
    %533 = vmatprep.mubr.f32.mxu0 0.0
    %534 = vmatmul.mubr.f32.gmra.mrb[0].mxu0 %v424
    %v535 = vpop.f32.mrb[0].mxu0
    %v536 = vadd.f32 %v375, %v535
    %v537 = vpop.f32.mrb[0].mxu0
    %538 = vmatprep.mubr.f32.mxu0 0.0
    %539 = vmatmul.mubr.f32.gmra.mrb[0].mxu0 %v427
    %v540 = vpop.f32.mrb[0].mxu0
    %v541 = vadd.f32 %v380, %v540
    %v542 = vpop.f32.mrb[0].mxu0
    %543 = vmatprep.mubr.f32.mxu0 0.0
    %544 = vmatmul.mubr.f32.gmra.mrb[0].mxu0 %v430
    %v545 = vpop.f32.mrb[0].mxu0
    %v546 = vadd.f32 %v385, %v545
    %v547 = vpop.f32.mrb[0].mxu0
    %548 = vmatprep.mubr.f32.mxu0 0.0
    %549 = vmatmul.mubr.f32.gmra.mrb[0].mxu0 %v433
    %v550 = vpop.f32.mrb[0].mxu0
    %v551 = vadd.f32 %v390, %v550
    %v552 = vpop.f32.mrb[0].mxu0
    %553 = vmatprep.mubr.f32.mxu0 0.0
    %554 = vmatmul.mubr.f32.gmra.mrb[0].mxu0 %v436
    %v555 = vpop.f32.mrb[0].mxu0
    %v556 = vadd.f32 %v395, %v555
    %v557 = vpop.f32.mrb[0].mxu0
    %558 = vmatprep.mubr.f32.mxu0 0.0
    %559 = vmatmul.mubr.f32.gmra.mrb[0].mxu0 %v439
    %v560 = vpop.f32.mrb[0].mxu0
    %v561 = vadd.f32 %v400, %v560
    %v562 = vpop.f32.mrb[0].mxu0
    %563 = vmatprep.mubr.f32.mxu0 0.0
    %564 = vmatmul.mubr.f32.gmra.mrb[0].mxu0 %v442
    %v565 = vpop.f32.mrb[0].mxu0
    %v566 = vadd.f32 %v405, %v565
    %v567 = vpop.f32.mrb[0].mxu0
    %568 = vdwg.mxu0
    %v569 = vmax.f32 %v511, 0.0
    %v570 = vmax.f32 %v516, 0.0
    %v571 = vmax.f32 %v521, 0.0
    %v572 = vmax.f32 %v526, 0.0
    %v573 = vmax.f32 %v531, 0.0
    %v574 = vmax.f32 %v536, 0.0
    %v575 = vmax.f32 %v541, 0.0
    %v576 = vmax.f32 %v546, 0.0
    %v577 = vmax.f32 %v551, 0.0
    %v578 = vmax.f32 %v556, 0.0
    %v579 = vmax.f32 %v561, 0.0
    %v580 = vmax.f32 %v566, 0.0
    %v581 = vmax.f32 %v569, %v575
    %v582 = vmax.f32 %v570, %v576
    %v583 = vmax.f32 %v571, %v577
    %v584 = vmax.f32 %v572, %v578
    %v585 = vmax.f32 %v573, %v579
    %v586 = vmax.f32 %v574, %v580
    %v587 = vld [vmem:[%s3] sm:$0xff]
    %v588 = vld [vmem:[%s3 + $0x8] sm:$0xff]
    %v589 = vld [vmem:[%s3 + $0x10] sm:$0xff]
    %v590 = vld [vmem:[%s3 + $0x18] sm:$0xff]
    %v591 = vld [vmem:[%s3 + $0x20] sm:$0xff]
    %v592 = vld [vmem:[%s3 + $0x28] sm:$0xff]
    %v593 = vld [vmem:[%s3 + $0x30] sm:$0xff]
    %v594 = vld [vmem:[%s3 + $0x38] sm:$0xff]
    %v595 = vld [vmem:[%s3 + $0x40] sm:$0xff]
    %v596 = vld [vmem:[%s3 + $0x48] sm:$0xff]
    %v597 = vld [vmem:[%s3 + $0x50] sm:$0xff]
    %v598 = vld [vmem:[%s3 + $0x58] sm:$0xff]
    %v599 = vld [vmem:[%s3 + $0x60] sm:$0xff]
    %v600 = vld [vmem:[%s3 + $0x68] sm:$0xff]
    %v601 = vld [vmem:[%s3 + $0x70] sm:$0xff]
    %v602 = vld [vmem:[%s3 + $0x78] sm:$0xff]
    %v603 = vld [vmem:[%s5] sm:$0xff]
    %v604 = vld [vmem:[%s5 + $0x8] sm:$0xff]
    %v605 = vld [vmem:[%s5 + $0x10] sm:$0xff]
    %v606 = vld [vmem:[%s5 + $0x18] sm:$0xff]
    %v607 = vld [vmem:[%s5 + $0x20] sm:$0xff]
    %v608 = vld [vmem:[%s5 + $0x28] sm:$0xff]
    %v609 = vld [vmem:[%s5 + $0x30] sm:$0xff]
    %v610 = vld [vmem:[%s5 + $0x38] sm:$0xff]
    %v611 = vld [vmem:[%s5 + $0x40] sm:$0xff]
    %v612 = vld [vmem:[%s5 + $0x48] sm:$0xff]
    %v613 = vld [vmem:[%s5 + $0x50] sm:$0xff]
    %v614 = vld [vmem:[%s5 + $0x58] sm:$0xff]
    %v615 = vld [vmem:[%s5 + $0x60] sm:$0xff]
    %v616 = vld [vmem:[%s5 + $0x68] sm:$0xff]
    %v617 = vld [vmem:[%s5 + $0x70] sm:$0xff]
    %v618 = vld [vmem:[%s5 + $0x78] sm:$0xff]
    %620 = vset.pattern.permute.xlu0 2
    %621 = vperm.xlu0 %620, %v603
    %v622 = vpop.permute.xlu0 %621
    %625 = vset.pattern.permute.xlu0 2
    %626 = vperm.xlu0 %625, %v604
    %v627 = vpop.permute.xlu0 %626
    %630 = vset.pattern.permute.xlu0 2
    %631 = vperm.xlu0 %630, %v605
    %v632 = vpop.permute.xlu0 %631
    %635 = vset.pattern.permute.xlu0 2
    %636 = vperm.xlu0 %635, %v606
    %v637 = vpop.permute.xlu0 %636
    %640 = vset.pattern.permute.xlu0 2
    %641 = vperm.xlu0 %640, %v607
    %v642 = vpop.permute.xlu0 %641
    %645 = vset.pattern.permute.xlu0 2
    %646 = vperm.xlu0 %645, %v608
    %v647 = vpop.permute.xlu0 %646
    %650 = vset.pattern.permute.xlu0 2
    %651 = vperm.xlu0 %650, %v609
    %v652 = vpop.permute.xlu0 %651
    %655 = vset.pattern.permute.xlu0 2
    %656 = vperm.xlu0 %655, %v610
    %v657 = vpop.permute.xlu0 %656
    %660 = vset.pattern.permute.xlu0 2
    %661 = vperm.xlu0 %660, %v611
    %v662 = vpop.permute.xlu0 %661
    %665 = vset.pattern.permute.xlu0 2
    %666 = vperm.xlu0 %665, %v612
    %v667 = vpop.permute.xlu0 %666
    %670 = vset.pattern.permute.xlu0 2
    %671 = vperm.xlu0 %670, %v613
    %v672 = vpop.permute.xlu0 %671
    %675 = vset.pattern.permute.xlu0 2
    %676 = vperm.xlu0 %675, %v614
    %v677 = vpop.permute.xlu0 %676
    %680 = vset.pattern.permute.xlu0 2
    %681 = vperm.xlu0 %680, %v615
    %v682 = vpop.permute.xlu0 %681
    %685 = vset.pattern.permute.xlu0 2
    %686 = vperm.xlu0 %685, %v616
    %v687 = vpop.permute.xlu0 %686
    %690 = vset.pattern.permute.xlu0 2
    %691 = vperm.xlu0 %690, %v617
    %v692 = vpop.permute.xlu0 %691
    %695 = vset.pattern.permute.xlu0 2
    %696 = vperm.xlu0 %695, %v618
    %v697 = vpop.permute.xlu0 %696
    %vm699 = vcmask 392192
    %v701 = vsel %vm699, %v587, 0
    %v704 = vsel %vm699, %v588, 0
    %v707 = vsel %vm699, %v589, 0
    %v710 = vsel %vm699, %v590, 0
    %v713 = vsel %vm699, %v591, 0
    %v716 = vsel %vm699, %v592, 0
    %v719 = vsel %vm699, %v593, 0
    %v722 = vsel %vm699, %v594, 0
    %v725 = vsel %vm699, %v595, 0
    %v728 = vsel %vm699, %v596, 0
    %v731 = vsel %vm699, %v597, 0
    %v734 = vsel %vm699, %v598, 0
    %v737 = vsel %vm699, %v599, 0
    %v740 = vsel %vm699, %v600, 0
    %v743 = vsel %vm699, %v601, 0
    %v746 = vsel %vm699, %v602, 0
    %748 = vmatprep.subr.mxu0 0.0
    %749 = vmatpush1.msra.mxu0 %v581
    %750 = vmatprep.subr.mxu0 0.0
    %751 = vmatpush1.msra.mxu0 %v582
    %752 = vmatprep.subr.mxu0 0.0
    %753 = vmatpush1.msra.mxu0 %v583
    %754 = vmatprep.subr.mxu0 0.0
    %755 = vmatpush1.msra.mxu0 %v584
    %756 = vmatprep.subr.mxu0 0.0
    %757 = vmatpush1.msra.mxu0 %v585
    %758 = vmatprep.subr.mxu0 0.0
    %759 = vmatpush1.msra.mxu0 %v586
    %760 = vmatprep.subr.mxu0 0.0
    %761 = vmatpush1.msra.mxu0 0.0
    %762 = vmatprep.subr.mxu0 0.0
    %763 = vmatpush1.msra.mxu0 0.0
    %764 = vmatprep.subr.mxu0 0.0
    %765 = vmatpush1.msra.mxu0 0.0
    %766 = vmatprep.subr.mxu0 0.0
    %767 = vmatpush1.msra.mxu0 0.0
    %768 = vmatprep.subr.mxu0 0.0
    %769 = vmatpush1.msra.mxu0 0.0
    %770 = vmatprep.subr.mxu0 0.0
    %771 = vmatpush1.msra.mxu0 0.0
    %772 = vmatprep.subr.mxu0 0.0
    %773 = vmatpush1.msra.mxu0 0.0
    %774 = vmatprep.subr.mxu0 0.0
    %775 = vmatpush1.msra.mxu0 0.0
    %776 = vmatprep.subr.mxu0 0.0
    %777 = vmatpush1.msra.mxu0 0.0
    %778 = vmatprep.subr.mxu0 0.0
    %779 = vmatpush1.msra.mxu0 0.0
    %780 = vmatprep.subr.mxu0 0.0
    %781 = vmatpush1.msra.mxu0 0.0
    %782 = vmatprep.subr.mxu0 0.0
    %783 = vmatpush1.msra.mxu0 0.0
    %784 = vmatprep.subr.mxu0 0.0
    %785 = vmatpush1.msra.mxu0 0.0
    %786 = vmatprep.subr.mxu0 0.0
    %787 = vmatpush1.msra.mxu0 0.0
    %788 = vmatprep.subr.mxu0 0.0
    %789 = vmatpush1.msra.mxu0 0.0
    %790 = vmatprep.subr.mxu0 0.0
    %791 = vmatpush1.msra.mxu0 0.0
    %792 = vmatprep.subr.mxu0 0.0
    %793 = vmatpush1.msra.mxu0 0.0
    %794 = vmatprep.subr.mxu0 0.0
    %795 = vmatpush1.msra.mxu0 0.0
    %796 = vmatprep.subr.mxu0 0.0
    %797 = vmatpush1.msra.mxu0 0.0
    %798 = vmatprep.subr.mxu0 0.0
    %799 = vmatpush1.msra.mxu0 0.0
    %800 = vmatprep.subr.mxu0 0.0
    %801 = vmatpush1.msra.mxu0 0.0
    %802 = vmatprep.subr.mxu0 0.0
    %803 = vmatpush1.msra.mxu0 0.0
    %804 = vmatprep.subr.mxu0 0.0
    %805 = vmatpush1.msra.mxu0 0.0
    %806 = vmatprep.subr.mxu0 0.0
    %807 = vmatpush1.msra.mxu0 0.0
    %808 = vmatprep.subr.mxu0 0.0
    %809 = vmatpush1.msra.mxu0 0.0
    %810 = vmatprep.subr.mxu0 0.0
    %811 = vmatpush1.msra.mxu0 0.0
    %812 = vmatprep.mubr.f32.mxu0 0.0
    %813 = vmatmul.mubr.f32.gmra.mrb[0].mxu0 %v701
    %v814 = vpop.f32.mrb[0].mxu0
    %v815 = vadd.f32 %v622, %v814
    %v816 = vpop.f32.mrb[0].mxu0
    %817 = vmatprep.mubr.f32.mxu0 0.0
    %818 = vmatmul.mubr.f32.gmra.mrb[0].mxu0 %v704
    %v819 = vpop.f32.mrb[0].mxu0
    %v820 = vadd.f32 %v627, %v819
    %v821 = vpop.f32.mrb[0].mxu0
    %822 = vmatprep.mubr.f32.mxu0 0.0
    %823 = vmatmul.mubr.f32.gmra.mrb[0].mxu0 %v707
    %v824 = vpop.f32.mrb[0].mxu0
    %v825 = vadd.f32 %v632, %v824
    %v826 = vpop.f32.mrb[0].mxu0
    %827 = vmatprep.mubr.f32.mxu0 0.0
    %828 = vmatmul.mubr.f32.gmra.mrb[0].mxu0 %v710
    %v829 = vpop.f32.mrb[0].mxu0
    %v830 = vadd.f32 %v637, %v829
    %v831 = vpop.f32.mrb[0].mxu0
    %832 = vmatprep.mubr.f32.mxu0 0.0
    %833 = vmatmul.mubr.f32.gmra.mrb[0].mxu0 %v713
    %v834 = vpop.f32.mrb[0].mxu0
    %v835 = vadd.f32 %v642, %v834
    %v836 = vpop.f32.mrb[0].mxu0
    %837 = vmatprep.mubr.f32.mxu0 0.0
    %838 = vmatmul.mubr.f32.gmra.mrb[0].mxu0 %v716
    %v839 = vpop.f32.mrb[0].mxu0
    %v840 = vadd.f32 %v647, %v839
    %v841 = vpop.f32.mrb[0].mxu0
    %842 = vmatprep.mubr.f32.mxu0 0.0
    %843 = vmatmul.mubr.f32.gmra.mrb[0].mxu0 %v719
    %v844 = vpop.f32.mrb[0].mxu0
    %v845 = vadd.f32 %v652, %v844
    %v846 = vpop.f32.mrb[0].mxu0
    %847 = vmatprep.mubr.f32.mxu0 0.0
    %848 = vmatmul.mubr.f32.gmra.mrb[0].mxu0 %v722
    %v849 = vpop.f32.mrb[0].mxu0
    %v850 = vadd.f32 %v657, %v849
    %v851 = vpop.f32.mrb[0].mxu0
    %852 = vmatprep.mubr.f32.mxu0 0.0
    %853 = vmatmul.mubr.f32.gmra.mrb[0].mxu0 %v725
    %v854 = vpop.f32.mrb[0].mxu0
    %v855 = vadd.f32 %v662, %v854
    %v856 = vpop.f32.mrb[0].mxu0
    %857 = vmatprep.mubr.f32.mxu0 0.0
    %858 = vmatmul.mubr.f32.gmra.mrb[0].mxu0 %v728
    %v859 = vpop.f32.mrb[0].mxu0
    %v860 = vadd.f32 %v667, %v859
    %v861 = vpop.f32.mrb[0].mxu0
    %862 = vmatprep.mubr.f32.mxu0 0.0
    %863 = vmatmul.mubr.f32.gmra.mrb[0].mxu0 %v731
    %v864 = vpop.f32.mrb[0].mxu0
    %v865 = vadd.f32 %v672, %v864
    %v866 = vpop.f32.mrb[0].mxu0
    %867 = vmatprep.mubr.f32.mxu0 0.0
    %868 = vmatmul.mubr.f32.gmra.mrb[0].mxu0 %v734
    %v869 = vpop.f32.mrb[0].mxu0
    %v870 = vadd.f32 %v677, %v869
    %v871 = vpop.f32.mrb[0].mxu0
    %872 = vmatprep.mubr.f32.mxu0 0.0
    %873 = vmatmul.mubr.f32.gmra.mrb[0].mxu0 %v737
    %v874 = vpop.f32.mrb[0].mxu0
    %v875 = vadd.f32 %v682, %v874
    %v876 = vpop.f32.mrb[0].mxu0
    %877 = vmatprep.mubr.f32.mxu0 0.0
    %878 = vmatmul.mubr.f32.gmra.mrb[0].mxu0 %v740
    %v879 = vpop.f32.mrb[0].mxu0
    %v880 = vadd.f32 %v687, %v879
    %v881 = vpop.f32.mrb[0].mxu0
    %882 = vmatprep.mubr.f32.mxu0 0.0
    %883 = vmatmul.mubr.f32.gmra.mrb[0].mxu0 %v743
    %v884 = vpop.f32.mrb[0].mxu0
    %v885 = vadd.f32 %v692, %v884
    %v886 = vpop.f32.mrb[0].mxu0
    %887 = vmatprep.mubr.f32.mxu0 0.0
    %888 = vmatmul.mubr.f32.gmra.mrb[0].mxu0 %v746
    %v889 = vpop.f32.mrb[0].mxu0
    %v890 = vadd.f32 %v697, %v889
    %v891 = vpop.f32.mrb[0].mxu0
    %892 = vdwg.mxu0
    %v893 = vmax.f32 %v815, 0.0
    %v894 = vmax.f32 %v820, 0.0
    %v895 = vmax.f32 %v825, 0.0
    %v896 = vmax.f32 %v830, 0.0
    %v897 = vmax.f32 %v835, 0.0
    %v898 = vmax.f32 %v840, 0.0
    %v899 = vmax.f32 %v845, 0.0
    %v900 = vmax.f32 %v850, 0.0
    %v901 = vmax.f32 %v855, 0.0
    %v902 = vmax.f32 %v860, 0.0
    %v903 = vmax.f32 %v865, 0.0
    %v904 = vmax.f32 %v870, 0.0
    %v905 = vmax.f32 %v875, 0.0
    %v906 = vmax.f32 %v880, 0.0
    %v907 = vmax.f32 %v885, 0.0
    %v908 = vmax.f32 %v890, 0.0
    %v909 = vmax.f32 %v893, %v901
    %v910 = vmax.f32 %v894, %v902
    %v911 = vmax.f32 %v895, %v903
    %v912 = vmax.f32 %v896, %v904
    %v913 = vmax.f32 %v897, %v905
    %v914 = vmax.f32 %v898, %v906
    %v915 = vmax.f32 %v899, %v907
    %v916 = vmax.f32 %v900, %v908
    %v917 = vld [vmem:[%s4] sm:$0xff]
    %v918 = vld [vmem:[%s5] sm:$0xff]
    %920 = vset.pattern.permute.xlu0 3
    %921 = vperm.xlu0 %920, %v918
    %v922 = vpop.permute.xlu0 %921
    %vm924 = vcmask 523264
    %v926 = vsel %vm924, %v917, 0
    %928 = vmatprep.subr.mxu0 0.0
    %929 = vmatpush1.msra.mxu0 %v909
    %930 = vmatprep.subr.mxu0 0.0
    %931 = vmatpush1.msra.mxu0 %v910
    %932 = vmatprep.subr.mxu0 0.0
    %933 = vmatpush1.msra.mxu0 %v911
    %934 = vmatprep.subr.mxu0 0.0
    %935 = vmatpush1.msra.mxu0 %v912
    %936 = vmatprep.subr.mxu0 0.0
    %937 = vmatpush1.msra.mxu0 %v913
    %938 = vmatprep.subr.mxu0 0.0
    %939 = vmatpush1.msra.mxu0 %v914
    %940 = vmatprep.subr.mxu0 0.0
    %941 = vmatpush1.msra.mxu0 %v915
    %942 = vmatprep.subr.mxu0 0.0
    %943 = vmatpush1.msra.mxu0 %v916
    %944 = vmatprep.subr.mxu0 0.0
    %945 = vmatpush1.msra.mxu0 0.0
    %946 = vmatprep.subr.mxu0 0.0
    %947 = vmatpush1.msra.mxu0 0.0
    %948 = vmatprep.subr.mxu0 0.0
    %949 = vmatpush1.msra.mxu0 0.0
    %950 = vmatprep.subr.mxu0 0.0
    %951 = vmatpush1.msra.mxu0 0.0
    %952 = vmatprep.subr.mxu0 0.0
    %953 = vmatpush1.msra.mxu0 0.0
    %954 = vmatprep.subr.mxu0 0.0
    %955 = vmatpush1.msra.mxu0 0.0
    %956 = vmatprep.subr.mxu0 0.0
    %957 = vmatpush1.msra.mxu0 0.0
    %958 = vmatprep.subr.mxu0 0.0
    %959 = vmatpush1.msra.mxu0 0.0
    %960 = vmatprep.subr.mxu0 0.0
    %961 = vmatpush1.msra.mxu0 0.0
    %962 = vmatprep.subr.mxu0 0.0
    %963 = vmatpush1.msra.mxu0 0.0
    %964 = vmatprep.subr.mxu0 0.0
    %965 = vmatpush1.msra.mxu0 0.0
    %966 = vmatprep.subr.mxu0 0.0
    %967 = vmatpush1.msra.mxu0 0.0
    %968 = vmatprep.subr.mxu0 0.0
    %969 = vmatpush1.msra.mxu0 0.0
    %970 = vmatprep.subr.mxu0 0.0
    %971 = vmatpush1.msra.mxu0 0.0
    %972 = vmatprep.subr.mxu0 0.0
    %973 = vmatpush1.msra.mxu0 0.0
    %974 = vmatprep.subr.mxu0 0.0
    %975 = vmatpush1.msra.mxu0 0.0
    %976 = vmatprep.subr.mxu0 0.0
    %977 = vmatpush1.msra.mxu0 0.0
    %978 = vmatprep.subr.mxu0 0.0
    %979 = vmatpush1.msra.mxu0 0.0
    %980 = vmatprep.subr.mxu0 0.0
    %981 = vmatpush1.msra.mxu0 0.0
    %982 = vmatprep.subr.mxu0 0.0
    %983 = vmatpush1.msra.mxu0 0.0
    %984 = vmatprep.subr.mxu0 0.0
    %985 = vmatpush1.msra.mxu0 0.0
    %986 = vmatprep.subr.mxu0 0.0
    %987 = vmatpush1.msra.mxu0 0.0
    %988 = vmatprep.subr.mxu0 0.0
    %989 = vmatpush1.msra.mxu0 0.0
    %990 = vmatprep.subr.mxu0 0.0
    %991 = vmatpush1.msra.mxu0 0.0
    %992 = vmatprep.mubr.f32.mxu0 0.0
    %993 = vmatmul.mubr.f32.gmra.mrb[0].mxu0 %v926
    %v994 = vpop.f32.mrb[0].mxu0
    %v995 = vadd.f32 %v922, %v994
    %v996 = vpop.f32.mrb[0].mxu0
    %997 = vdwg.mxu0
    %998 = vst [vmem:[#allocation2] sm:$0xff] %v995
    // Predicated region
    $region26: #{tpu_custom_call.1} parent=1 // pred_check
      _
    $region27: #{tpu_custom_call.1} parent=1 // pred_check_branch
      %1000 = sbr.rel (0) target = $region29
    $region28: #{tpu_custom_call.1} parent=1 // pred_region
      %s1002 = ssub.s32 128, 128
      %1003 = vsyncadd [#allocation3], %s1002
      %s1005 = sshll.u32 [#allocation2], 4
      %s1006 = int_to_ptr.vmem [resolvable:$true] %s1005
      %1008 = dma.vmem_to_hbm [thread:$0]  %s1006, 128, %s6, [#allocation3]
    $region29: #{tpu_custom_call.1} parent=1 // pred_fallthru
      _
    // Predicated region
    $region30: #{tpu_custom_call.1} parent=1 // pred_check
      _
    $region31: #{tpu_custom_call.1} parent=1 // pred_check_branch
      %1010 = sbr.rel (0) target = $region33
    $region32: #{tpu_custom_call.1} parent=1 // pred_region
      %1011 = dma.done [#allocation3], 128
    $region33: #{tpu_custom_call.1} parent=1 // pred_fallthru
      _
    %1012 = vsyncpa [#allocation3], 1

</llo_original>
